<compile_context>
chip_gen: v7x
topology: tpu7x:2x2x1
jax: 0.10.0
libtpu: 0.0.40
codegen_flags: <defaults>
</compile_context>

<pallas_src>
import math
import functools

import jax
import jax.numpy as jnp
from jax.experimental import pallas as pl
from jax.experimental.pallas import tpu as pltpu


def _round_up(n, m):
    return ((n + m - 1) // m) * m


def _itemsize(dt):
    return jax.dtypes.canonicalize_dtype(dt).itemsize


# ------------------------------------------------------------- VMEM budgeting
def _vmem_budget():
    """(capacity, usable limit) in bytes, per TensorCore, generation-aware."""
    try:
        cap = int(pltpu.get_tpu_info().vmem_capacity_bytes)
    except Exception:
        cap = 64 * 1024 * 1024          # conservative: assume v7x's 64 MiB/TC
    # Leave ~25% headroom for compiler-internal scratch; cap at 96 MiB.
    limit = min((cap * 3) // 4, 96 * 1024 * 1024)
    return cap, limit


def _single_buffer_supported():
    """Can we request single-buffering (pipeline_mode=pl.Buffered(1))?"""
    if not hasattr(pl, "Buffered"):
        return False
    try:
        pl.BlockSpec((8, 128), lambda i: (0, 0), pipeline_mode=pl.Buffered(1))
        return True
    except Exception:
        return False


_SINGLE_BUFFER_OK = _single_buffer_supported()


def _grid_const_spec(shape, single_buffer):
    """BlockSpec for a block whose index_map is constant across the grid."""
    if single_buffer:
        return pl.BlockSpec(shape, lambda i: (0, 0), pipeline_mode=pl.Buffered(1))
    return pl.BlockSpec(shape, lambda i: (0, 0))


# ------------------------------------------------------------------ fused MLP
def _fused_mlp_kernel(*refs, n_layers, compute_dtype):
    """refs = (x, w0, b0, w1, b1, ..., o). Runs the whole MLP for one row tile."""
    x_ref = refs[0]
    o_ref = refs[1 + 2 * n_layers]
    h = x_ref[...]                                       # (tm, D0_pad) bf16
    for l in range(n_layers):
        w_ref = refs[1 + 2 * l]                          # (K_pad, N_pad) bf16
        b_ref = refs[2 + 2 * l]                          # (1,  N_pad)  f32
        acc = jnp.dot(h.astype(compute_dtype), w_ref[...],
                      preferred_element_type=jnp.float32)  # MXU, f32 accumulate
        acc = acc + b_ref[...]                           # f32 epilogue
        if l < n_layers - 1:
            acc = jnp.maximum(acc, 0.0)                  # ReLU between layers
            h = acc.astype(compute_dtype)                # bf16 into next MXU
        else:
            h = acc
    o_ref[...] = h.astype(o_ref.dtype)


def _fused_mlp_call(x_pad, w_pads, b_pads, *, tm, compute_dtype, out_dtype,
                    vmem_limit, single_buffer):
    M_pad, d0 = x_pad.shape
    n_layers = len(w_pads)
    n_out = w_pads[-1].shape[1]

    inputs = [x_pad]
    in_specs = [pl.BlockSpec((tm, d0), lambda i: (i, 0))]
    for w_pad, b_pad in zip(w_pads, b_pads):
        kp, np_ = w_pad.shape
        inputs += [w_pad, b_pad]
        in_specs += [_grid_const_spec((kp, np_), single_buffer),
                     _grid_const_spec((1, np_), single_buffer)]

    kernel = functools.partial(_fused_mlp_kernel, n_layers=n_layers,
                               compute_dtype=compute_dtype)
    return pl.pallas_call(
        kernel,
        out_shape=jax.ShapeDtypeStruct((M_pad, n_out), out_dtype),
        grid=(M_pad // tm,),
        in_specs=in_specs,
        out_specs=pl.BlockSpec((tm, n_out), lambda i: (i, 0)),
        compiler_params=pltpu.CompilerParams(
            dimension_semantics=("parallel",),          # shards across v7x's 2 TCs
            vmem_limit_bytes=vmem_limit,
        ),
    )(*inputs)


def _choose_fused_tm(M, dims_pad, wb_bytes, c_itemsize, o_itemsize,
                     vmem_limit, weight_buf):
    """Largest row tile that fits the VMEM budget; prefers >= 2 grid steps."""
    M_min = _round_up(max(M, 16), 16)      # >=16 rows: one full bf16 vreg of sublanes
    max_np = max(dims_pad[1:])

    def need(tm):
        return (weight_buf * wb_bytes                       # resident weights/biases
                + 2 * tm * dims_pad[0] * c_itemsize          # double-buffered x tiles
                + 2 * tm * dims_pad[-1] * o_itemsize         # double-buffered out tiles
                + 3 * tm * max_np * 4)                       # live f32 activation headroom

    candidates = [c for c in (512, 256, 128, 64, 32, 16) if need(c) <= vmem_limit]
    if not candidates:
        return None
    # Prefer the largest tile that still yields >= 2 grid steps (keeps both of
    # v7x's TensorCores busy); otherwise the largest tile not over-padding M.
    for c in candidates:
        if c <= M_min and _round_up(M_min, c) // c >= 2:
            return c
    for c in candidates:
        if c <= M_min:
            return c
    return candidates[-1]


# ------------------------------------------------- tiled per-layer fallback
def _tiled_linear_kernel(x_ref, w_ref, b_ref, o_ref, acc_ref, *, apply_relu):
    k = pl.program_id(2)

    @pl.when(k == 0)
    def _():
        acc_ref[...] = jnp.zeros_like(acc_ref)

    acc_ref[...] += jnp.dot(x_ref[...], w_ref[...],
                            preferred_element_type=jnp.float32)

    @pl.when(k == pl.num_programs(2) - 1)
    def _():
        y = acc_ref[...] + b_ref[...]
        if apply_relu:
            y = jnp.maximum(y, 0.0)
        o_ref[...] = y.astype(o_ref.dtype)


def _pick_tile(dim, candidates):
    for c in candidates:
        if dim % c == 0:
            return c
    return dim


def pallas_linear_tiled(x_pad, w_pad, b_pad, *, apply_relu, out_dtype, vmem_limit):
    """y = relu?(x @ w + b) on padded operands; K-reduction grid + f32 accumulator."""
    M_pad, K_pad = x_pad.shape
    _, N_pad = w_pad.shape
    tm = _pick_tile(M_pad, (512, 256, 128, 64, 32, 16, 8))
    tn = _pick_tile(N_pad, (512, 256, 128))
    tk = _pick_tile(K_pad, (1024, 512, 256, 128))
    kernel = functools.partial(_tiled_linear_kernel, apply_relu=apply_relu)
    return pl.pallas_call(
        kernel,
        out_shape=jax.ShapeDtypeStruct((M_pad, N_pad), out_dtype),
        grid=(M_pad // tm, N_pad // tn, K_pad // tk),
        in_specs=[
            pl.BlockSpec((tm, tk), lambda i, j, k: (i, k)),
            pl.BlockSpec((tk, tn), lambda i, j, k: (k, j)),
            pl.BlockSpec((1, tn), lambda i, j, k: (0, j)),
        ],
        out_specs=pl.BlockSpec((tm, tn), lambda i, j, k: (i, j)),
        scratch_shapes=[pltpu.VMEM((tm, tn), jnp.float32)],
        compiler_params=pltpu.CompilerParams(
            dimension_semantics=("parallel", "parallel", "arbitrary"),
            vmem_limit_bytes=vmem_limit,
        ),
    )(x_pad, w_pad, b_pad)


# ----------------------------------------------------------------- module API
def init_mlp_params(key, input_dim, hidden_dims, output_dim):
    """Deterministic init mirroring nn.Linear's default U(-1/sqrt(fan_in), ...).
    Weights stored as [in_features, out_features] (transpose of PyTorch)."""
    dims = [input_dim] + list(hidden_dims) + [output_dim]
    params = []
    for i in range(len(dims) - 1):
        fan_in, fan_out = dims[i], dims[i + 1]
        key, kw, kb = jax.random.split(key, 3)
        bound = 1.0 / math.sqrt(fan_in)
        w = jax.random.uniform(kw, (fan_in, fan_out), jnp.float32, -bound, bound)
        b = jax.random.uniform(kb, (fan_out,), jnp.float32, -bound, bound)
        params.append((w, b))
    return params


def prepare_mlp(params, input_dim, *, compute_dtype=jnp.bfloat16):
    """Pad + cast weights/biases ONCE (hoisted out of the per-call forward).
    Features are zero-padded to multiples of 128 (lane-dense); zeros are inert
    through matmul, bias-add and ReLU, so padded columns stay zero layer to layer."""
    dims = [input_dim] + [w.shape[1] for (w, _) in params]
    dims_pad = [_round_up(d, 128) for d in dims]
    w_pads, b_pads = [], []
    for l, (w, b) in enumerate(params):
        kp, np_ = dims_pad[l], dims_pad[l + 1]
        w_pads.append(jnp.zeros((kp, np_), compute_dtype)
                      .at[:w.shape[0], :w.shape[1]].set(w.astype(compute_dtype)))
        b_pads.append(jnp.zeros((1, np_), jnp.float32)
                      .at[0, :b.shape[0]].set(b.astype(jnp.float32)))
    # TODO(synk): optional fp8 (e4m3) weight storage for the v7x MXU fast path.
    return {
        "dims": tuple(dims),
        "dims_pad": tuple(dims_pad),
        "w_pads": tuple(w_pads),
        "b_pads": tuple(b_pads),
        "compute_dtype": compute_dtype,
    }


def mlp_forward(prepared, x, *, out_dtype=None, force_tiled=False):
    """Hidden layers: Linear + ReLU; final layer: Linear only
    (activation='relu', batch_norm=None, dropout=None — the module defaults)."""
    dims, dims_pad = prepared["dims"], prepared["dims_pad"]
    w_pads, b_pads = prepared["w_pads"], prepared["b_pads"]
    compute_dtype = prepared["compute_dtype"]
    if out_dtype is None:
        out_dtype = compute_dtype                  # bf16 output store by default

    M, d_in = x.shape
    assert d_in == dims[0], "input feature dim mismatch"
    n_layers = len(w_pads)
    c_itemsize = _itemsize(compute_dtype)
    o_itemsize = _itemsize(out_dtype)

    _, vmem_limit = _vmem_budget()
    weight_buf = 1 if _SINGLE_BUFFER_OK else 2
    # bias (1,N) f32 pads to 8 sublanes in VMEM
    wb_bytes = sum(w.size * w.dtype.itemsize + 8 * w.shape[1] * 4 for w in w_pads)

    tm = _choose_fused_tm(M, dims_pad, wb_bytes, c_itemsize, o_itemsize,
                          vmem_limit, weight_buf)
    use_fused = (not force_tiled) and (tm is not None)

    if use_fused:
        M_pad = _round_up(max(M, 16), tm)
        x_pad = (jnp.zeros((M_pad, dims_pad[0]), compute_dtype)
                 .at[:M, :d_in].set(x.astype(compute_dtype)))
        try:
            out_pad = _fused_mlp_call(x_pad, w_pads, b_pads, tm=tm,
                                      compute_dtype=compute_dtype,
                                      out_dtype=out_dtype,
                                      vmem_limit=vmem_limit,
                                      single_buffer=_SINGLE_BUFFER_OK)
        except Exception:
            # Fall back to double-buffered weight specs if single-buffering is
            # rejected by this Pallas version.
            out_pad = _fused_mlp_call(x_pad, w_pads, b_pads, tm=tm,
                                      compute_dtype=compute_dtype,
                                      out_dtype=out_dtype,
                                      vmem_limit=vmem_limit,
                                      single_buffer=False)
    else:
        M_pad = _round_up(max(M, 16), 16)
        h = (jnp.zeros((M_pad, dims_pad[0]), compute_dtype)
             .at[:M, :d_in].set(x.astype(compute_dtype)))
        for l in range(n_layers):
            is_last = (l == n_layers - 1)
            h = pallas_linear_tiled(
                h, w_pads[l], b_pads[l],
                apply_relu=not is_last,
                out_dtype=(out_dtype if is_last else compute_dtype),
                vmem_limit=vmem_limit)
        out_pad = h

    return out_pad[:M, :dims[-1]]


if __name__ == "__main__":
    # Small, forward-consistent shapes (MLP(32, [64, 48], 16)).
    batch = 8
    input_dim = 32
    hidden_dims = [64, 48]
    output_dim = 16

    key = jax.random.PRNGKey(0)
    key_x, key_x2, key_p = jax.random.split(key, 3)

    x = jax.random.normal(key_x, (batch, input_dim), jnp.float32)
    params = init_mlp_params(key_p, input_dim, hidden_dims, output_dim)
    prepared = prepare_mlp(params, input_dim)          # weights padded/cast ONCE

    out_fused = jax.block_until_ready(mlp_forward(prepared, x))
    out_tiled = jax.block_until_ready(mlp_forward(prepared, x, force_tiled=True))

    # Slightly larger batch exercises the multi-step "parallel" row grid.
    x2 = jax.random.normal(key_x2, (96, input_dim), jnp.float32)
    out_fused2 = jax.block_until_ready(mlp_forward(prepared, x2))

    # References: same bf16-matmul / f32-accumulate math, plus full-f32 math.
    def ref_mlp(ps, xin, bf16):
        h = xin
        for i, (w, b) in enumerate(ps):
            if bf16:
                h = jnp.dot(h.astype(jnp.bfloat16), w.astype(jnp.bfloat16),
                            preferred_element_type=jnp.float32) + b
            else:
                h = h @ w + b
            if i < len(ps) - 1:
                h = jnp.maximum(h, 0.0)
        return h

    ref_bf16 = ref_mlp(params, x, bf16=True)
    ref_f32 = ref_mlp(params, x, bf16=False)
    ref2_bf16 = ref_mlp(params, x2, bf16=True)

    assert out_fused.shape == (batch, output_dim)
    assert out_fused2.shape == (96, output_dim)

    of = out_fused.astype(jnp.float32)
    ot = out_tiled.astype(jnp.float32)
    of2 = out_fused2.astype(jnp.float32)

    assert jnp.allclose(of, ref_bf16, atol=2e-2, rtol=2e-2), \
        "fused kernel mismatch vs bf16 reference"
    assert jnp.allclose(ot, ref_bf16, atol=2e-2, rtol=2e-2), \
        "tiled kernel mismatch vs bf16 reference"
    assert jnp.allclose(of2, ref2_bf16, atol=2e-2, rtol=2e-2), \
        "fused kernel (batch=96) mismatch vs bf16 reference"
    # Semantic check vs full-f32 math (bf16 rounding of matmul inputs/output only).
    assert jnp.allclose(of, ref_f32, atol=6e-2, rtol=6e-2), \
        "fused kernel mismatch vs f32 reference"

    # TODO(synk): nn.BatchNorm1d / nn.Dropout branches (disabled by default in
    # MLP.__init__) are not implemented.
    print("KERNEL_OK")
</pallas_src>

<mosaic_0001>
module attributes {stable_mosaic.version = 11 : i64} {
  func.func @_fused_mlp_kernel(%arg0: i32, %arg1: memref<16x128xbf16, #tpu.memory_space<vmem>>, %arg2: memref<128x128xbf16, #tpu.memory_space<vmem>>, %arg3: memref<1x128xf32, #tpu.memory_space<vmem>>, %arg4: memref<128x128xbf16, #tpu.memory_space<vmem>>, %arg5: memref<1x128xf32, #tpu.memory_space<vmem>>, %arg6: memref<128x128xbf16, #tpu.memory_space<vmem>>, %arg7: memref<1x128xf32, #tpu.memory_space<vmem>>, %arg8: memref<16x128xbf16, #tpu.memory_space<vmem>>) attributes {dimension_semantics = [#tpu.dimension_semantics<parallel>], iteration_bounds = array<i64: 1>, scalar_prefetch = 0 : i64, scratch_operands = 0 : i64, tpu.core_type = #tpu.core_type<tc>, window_params = [{transform_indices = @transform_0, window_bounds = array<i64: 16, 128>}, {pipeline_mode = #tpu.pipeline_mode<synchronous>, transform_indices = @transform_1, window_bounds = array<i64: 128, 128>}, {pipeline_mode = #tpu.pipeline_mode<synchronous>, transform_indices = @transform_2, window_bounds = array<i64: 1, 128>}, {pipeline_mode = #tpu.pipeline_mode<synchronous>, transform_indices = @transform_3, window_bounds = array<i64: 128, 128>}, {pipeline_mode = #tpu.pipeline_mode<synchronous>, transform_indices = @transform_4, window_bounds = array<i64: 1, 128>}, {pipeline_mode = #tpu.pipeline_mode<synchronous>, transform_indices = @transform_5, window_bounds = array<i64: 128, 128>}, {pipeline_mode = #tpu.pipeline_mode<synchronous>, transform_indices = @transform_6, window_bounds = array<i64: 1, 128>}, {transform_indices = @transform_7, window_bounds = array<i64: 16, 128>}]} {
    %c0 = arith.constant 0 : index
    %c0_0 = arith.constant 0 : index
    %0 = vector.load %arg1[%c0, %c0_0] : memref<16x128xbf16, #tpu.memory_space<vmem>>, vector<16x128xbf16>
    %c0_1 = arith.constant 0 : index
    %c0_2 = arith.constant 0 : index
    %1 = vector.load %arg2[%c0_1, %c0_2] : memref<128x128xbf16, #tpu.memory_space<vmem>>, vector<128x128xbf16>
    %cst = arith.constant dense<0.000000e+00> : vector<16x128xf32>
    %2 = tpu.matmul %0, %1, %cst {dimension_numbers = #tpu.dot_dimension_numbers<[1], [0], [0], [1], [0, 0, 1, 1], [], []>} : vector<16x128xbf16>, vector<128x128xbf16>, vector<16x128xf32> -> vector<16x128xf32>
    %c0_3 = arith.constant 0 : index
    %c0_4 = arith.constant 0 : index
    %3 = vector.load %arg3[%c0_3, %c0_4] : memref<1x128xf32, #tpu.memory_space<vmem>>, vector<1x128xf32>
    %4 = vector.broadcast %3 : vector<1x128xf32> to vector<16x128xf32>
    %5 = arith.addf %2, %4 : vector<16x128xf32>
    %cst_5 = arith.constant 0.000000e+00 : f32
    %6 = vector.broadcast %cst_5 : f32 to vector<16x128xf32>
    %7 = arith.maximumf %5, %6 : vector<16x128xf32>
    %8 = arith.truncf %7 : vector<16x128xf32> to vector<16x128xbf16>
    %c0_6 = arith.constant 0 : index
    %c0_7 = arith.constant 0 : index
    %9 = vector.load %arg4[%c0_6, %c0_7] : memref<128x128xbf16, #tpu.memory_space<vmem>>, vector<128x128xbf16>
    %cst_8 = arith.constant dense<0.000000e+00> : vector<16x128xf32>
    %10 = tpu.matmul %8, %9, %cst_8 {dimension_numbers = #tpu.dot_dimension_numbers<[1], [0], [0], [1], [0, 0, 1, 1], [], []>} : vector<16x128xbf16>, vector<128x128xbf16>, vector<16x128xf32> -> vector<16x128xf32>
    %c0_9 = arith.constant 0 : index
    %c0_10 = arith.constant 0 : index
    %11 = vector.load %arg5[%c0_9, %c0_10] : memref<1x128xf32, #tpu.memory_space<vmem>>, vector<1x128xf32>
    %12 = vector.broadcast %11 : vector<1x128xf32> to vector<16x128xf32>
    %13 = arith.addf %10, %12 : vector<16x128xf32>
    %cst_11 = arith.constant 0.000000e+00 : f32
    %14 = vector.broadcast %cst_11 : f32 to vector<16x128xf32>
    %15 = arith.maximumf %13, %14 : vector<16x128xf32>
    %16 = arith.truncf %15 : vector<16x128xf32> to vector<16x128xbf16>
    %c0_12 = arith.constant 0 : index
    %c0_13 = arith.constant 0 : index
    %17 = vector.load %arg6[%c0_12, %c0_13] : memref<128x128xbf16, #tpu.memory_space<vmem>>, vector<128x128xbf16>
    %cst_14 = arith.constant dense<0.000000e+00> : vector<16x128xf32>
    %18 = tpu.matmul %16, %17, %cst_14 {dimension_numbers = #tpu.dot_dimension_numbers<[1], [0], [0], [1], [0, 0, 1, 1], [], []>} : vector<16x128xbf16>, vector<128x128xbf16>, vector<16x128xf32> -> vector<16x128xf32>
    %c0_15 = arith.constant 0 : index
    %c0_16 = arith.constant 0 : index
    %19 = vector.load %arg7[%c0_15, %c0_16] : memref<1x128xf32, #tpu.memory_space<vmem>>, vector<1x128xf32>
    %20 = vector.broadcast %19 : vector<1x128xf32> to vector<16x128xf32>
    %21 = arith.addf %18, %20 : vector<16x128xf32>
    %22 = arith.truncf %21 : vector<16x128xf32> to vector<16x128xbf16>
    %c0_17 = arith.constant 0 : index
    %c0_18 = arith.constant 0 : index
    %23 = vector.load %arg8[%c0_17, %c0_18] : memref<16x128xbf16, #tpu.memory_space<vmem>>, vector<16x128xbf16>
    tpu.vector_store %arg8[%c0_17, %c0_18], %22 {strides = array<i32>} : memref<16x128xbf16, #tpu.memory_space<vmem>>, vector<16x128xbf16>,
    return
  }
  func.func @transform_0(%arg0: i32) -> (i32, i32) {
    %c0_i32 = arith.constant 0 : i32
    %c0_i32_0 = arith.constant 0 : i32
    return %arg0, %c0_i32 : i32, i32
  }
  func.func @transform_1(%arg0: i32) -> (i32, i32) {
    %c0_i32 = arith.constant 0 : i32
    %c0_i32_0 = arith.constant 0 : i32
    %c0_i32_1 = arith.constant 0 : i32
    return %c0_i32, %c0_i32_0 : i32, i32
  }
  func.func @transform_2(%arg0: i32) -> (i32, i32) {
    %c0_i32 = arith.constant 0 : i32
    %c0_i32_0 = arith.constant 0 : i32
    %c0_i32_1 = arith.constant 0 : i32
    return %c0_i32, %c0_i32_0 : i32, i32
  }
  func.func @transform_3(%arg0: i32) -> (i32, i32) {
    %c0_i32 = arith.constant 0 : i32
    %c0_i32_0 = arith.constant 0 : i32
    %c0_i32_1 = arith.constant 0 : i32
    return %c0_i32, %c0_i32_0 : i32, i32
  }
  func.func @transform_4(%arg0: i32) -> (i32, i32) {
    %c0_i32 = arith.constant 0 : i32
    %c0_i32_0 = arith.constant 0 : i32
    %c0_i32_1 = arith.constant 0 : i32
    return %c0_i32, %c0_i32_0 : i32, i32
  }
  func.func @transform_5(%arg0: i32) -> (i32, i32) {
    %c0_i32 = arith.constant 0 : i32
    %c0_i32_0 = arith.constant 0 : i32
    %c0_i32_1 = arith.constant 0 : i32
    return %c0_i32, %c0_i32_0 : i32, i32
  }
  func.func @transform_6(%arg0: i32) -> (i32, i32) {
    %c0_i32 = arith.constant 0 : i32
    %c0_i32_0 = arith.constant 0 : i32
    %c0_i32_1 = arith.constant 0 : i32
    return %c0_i32, %c0_i32_0 : i32, i32
  }
  func.func @transform_7(%arg0: i32) -> (i32, i32) {
    %c0_i32 = arith.constant 0 : i32
    %c0_i32_0 = arith.constant 0 : i32
    return %arg0, %c0_i32 : i32, i32
  }
}

module attributes {stable_mosaic.version = 11 : i64} {
  func.func @_fused_mlp_kernel(%arg0: i32, %arg1: memref<16x128xbf16, #tpu.memory_space<vmem>>, %arg2: memref<128x128xbf16, #tpu.memory_space<vmem>>, %arg3: memref<1x128xf32, #tpu.memory_space<vmem>>, %arg4: memref<128x128xbf16, #tpu.memory_space<vmem>>, %arg5: memref<1x128xf32, #tpu.memory_space<vmem>>, %arg6: memref<128x128xbf16, #tpu.memory_space<vmem>>, %arg7: memref<1x128xf32, #tpu.memory_space<vmem>>, %arg8: memref<16x128xbf16, #tpu.memory_space<vmem>>) attributes {dimension_semantics = [#tpu.dimension_semantics<parallel>], iteration_bounds = array<i64: 1>, scalar_prefetch = 0 : i64, scratch_operands = 0 : i64, tpu.core_type = #tpu.core_type<tc>, window_params = [{transform_indices = @transform_0, window_bounds = array<i64: 16, 128>}, {pipeline_mode = #tpu.pipeline_mode<synchronous>, transform_indices = @transform_1, window_bounds = array<i64: 128, 128>}, {pipeline_mode = #tpu.pipeline_mode<synchronous>, transform_indices = @transform_2, window_bounds = array<i64: 1, 128>}, {pipeline_mode = #tpu.pipeline_mode<synchronous>, transform_indices = @transform_3, window_bounds = array<i64: 128, 128>}, {pipeline_mode = #tpu.pipeline_mode<synchronous>, transform_indices = @transform_4, window_bounds = array<i64: 1, 128>}, {pipeline_mode = #tpu.pipeline_mode<synchronous>, transform_indices = @transform_5, window_bounds = array<i64: 128, 128>}, {pipeline_mode = #tpu.pipeline_mode<synchronous>, transform_indices = @transform_6, window_bounds = array<i64: 1, 128>}, {transform_indices = @transform_7, window_bounds = array<i64: 16, 128>}]} {
    %c0 = arith.constant 0 : index
    %c0_0 = arith.constant 0 : index
    %0 = vector.load %arg1[%c0, %c0_0] : memref<16x128xbf16, #tpu.memory_space<vmem>>, vector<16x128xbf16>
    %c0_1 = arith.constant 0 : index
    %c0_2 = arith.constant 0 : index
    %1 = vector.load %arg2[%c0_1, %c0_2] : memref<128x128xbf16, #tpu.memory_space<vmem>>, vector<128x128xbf16>
    %cst = arith.constant dense<0.000000e+00> : vector<16x128xf32>
    %2 = tpu.matmul %0, %1, %cst {dimension_numbers = #tpu.dot_dimension_numbers<[1], [0], [0], [1], [0, 0, 1, 1], [], []>} : vector<16x128xbf16>, vector<128x128xbf16>, vector<16x128xf32> -> vector<16x128xf32>
    %c0_3 = arith.constant 0 : index
    %c0_4 = arith.constant 0 : index
    %3 = vector.load %arg3[%c0_3, %c0_4] : memref<1x128xf32, #tpu.memory_space<vmem>>, vector<1x128xf32>
    %4 = vector.broadcast %3 : vector<1x128xf32> to vector<16x128xf32>
    %5 = arith.addf %2, %4 : vector<16x128xf32>
    %cst_5 = arith.constant 0.000000e+00 : f32
    %6 = vector.broadcast %cst_5 : f32 to vector<16x128xf32>
    %7 = arith.maximumf %5, %6 : vector<16x128xf32>
    %8 = arith.truncf %7 : vector<16x128xf32> to vector<16x128xbf16>
    %c0_6 = arith.constant 0 : index
    %c0_7 = arith.constant 0 : index
    %9 = vector.load %arg4[%c0_6, %c0_7] : memref<128x128xbf16, #tpu.memory_space<vmem>>, vector<128x128xbf16>
    %cst_8 = arith.constant dense<0.000000e+00> : vector<16x128xf32>
    %10 = tpu.matmul %8, %9, %cst_8 {dimension_numbers = #tpu.dot_dimension_numbers<[1], [0], [0], [1], [0, 0, 1, 1], [], []>} : vector<16x128xbf16>, vector<128x128xbf16>, vector<16x128xf32> -> vector<16x128xf32>
    %c0_9 = arith.constant 0 : index
    %c0_10 = arith.constant 0 : index
    %11 = vector.load %arg5[%c0_9, %c0_10] : memref<1x128xf32, #tpu.memory_space<vmem>>, vector<1x128xf32>
    %12 = vector.broadcast %11 : vector<1x128xf32> to vector<16x128xf32>
    %13 = arith.addf %10, %12 : vector<16x128xf32>
    %cst_11 = arith.constant 0.000000e+00 : f32
    %14 = vector.broadcast %cst_11 : f32 to vector<16x128xf32>
    %15 = arith.maximumf %13, %14 : vector<16x128xf32>
    %16 = arith.truncf %15 : vector<16x128xf32> to vector<16x128xbf16>
    %c0_12 = arith.constant 0 : index
    %c0_13 = arith.constant 0 : index
    %17 = vector.load %arg6[%c0_12, %c0_13] : memref<128x128xbf16, #tpu.memory_space<vmem>>, vector<128x128xbf16>
    %cst_14 = arith.constant dense<0.000000e+00> : vector<16x128xf32>
    %18 = tpu.matmul %16, %17, %cst_14 {dimension_numbers = #tpu.dot_dimension_numbers<[1], [0], [0], [1], [0, 0, 1, 1], [], []>} : vector<16x128xbf16>, vector<128x128xbf16>, vector<16x128xf32> -> vector<16x128xf32>
    %c0_15 = arith.constant 0 : index
    %c0_16 = arith.constant 0 : index
    %19 = vector.load %arg7[%c0_15, %c0_16] : memref<1x128xf32, #tpu.memory_space<vmem>>, vector<1x128xf32>
    %20 = vector.broadcast %19 : vector<1x128xf32> to vector<16x128xf32>
    %21 = arith.addf %18, %20 : vector<16x128xf32>
    %22 = arith.truncf %21 : vector<16x128xf32> to vector<16x128xbf16>
    %c0_17 = arith.constant 0 : index
    %c0_18 = arith.constant 0 : index
    %23 = vector.load %arg8[%c0_17, %c0_18] : memref<16x128xbf16, #tpu.memory_space<vmem>>, vector<16x128xbf16>
    tpu.vector_store %arg8[%c0_17, %c0_18], %22 {strides = array<i32>} : memref<16x128xbf16, #tpu.memory_space<vmem>>, vector<16x128xbf16>,
    return
  }
  func.func @transform_0(%arg0: i32) -> (i32, i32) {
    %c0_i32 = arith.constant 0 : i32
    %c0_i32_0 = arith.constant 0 : i32
    return %arg0, %c0_i32 : i32, i32
  }
  func.func @transform_1(%arg0: i32) -> (i32, i32) {
    %c0_i32 = arith.constant 0 : i32
    %c0_i32_0 = arith.constant 0 : i32
    %c0_i32_1 = arith.constant 0 : i32
    return %c0_i32, %c0_i32_0 : i32, i32
  }
  func.func @transform_2(%arg0: i32) -> (i32, i32) {
    %c0_i32 = arith.constant 0 : i32
    %c0_i32_0 = arith.constant 0 : i32
    %c0_i32_1 = arith.constant 0 : i32
    return %c0_i32, %c0_i32_0 : i32, i32
  }
  func.func @transform_3(%arg0: i32) -> (i32, i32) {
    %c0_i32 = arith.constant 0 : i32
    %c0_i32_0 = arith.constant 0 : i32
    %c0_i32_1 = arith.constant 0 : i32
    return %c0_i32, %c0_i32_0 : i32, i32
  }
  func.func @transform_4(%arg0: i32) -> (i32, i32) {
    %c0_i32 = arith.constant 0 : i32
    %c0_i32_0 = arith.constant 0 : i32
    %c0_i32_1 = arith.constant 0 : i32
    return %c0_i32, %c0_i32_0 : i32, i32
  }
  func.func @transform_5(%arg0: i32) -> (i32, i32) {
    %c0_i32 = arith.constant 0 : i32
    %c0_i32_0 = arith.constant 0 : i32
    %c0_i32_1 = arith.constant 0 : i32
    return %c0_i32, %c0_i32_0 : i32, i32
  }
  func.func @transform_6(%arg0: i32) -> (i32, i32) {
    %c0_i32 = arith.constant 0 : i32
    %c0_i32_0 = arith.constant 0 : i32
    %c0_i32_1 = arith.constant 0 : i32
    return %c0_i32, %c0_i32_0 : i32, i32
  }
  func.func @transform_7(%arg0: i32) -> (i32, i32) {
    %c0_i32 = arith.constant 0 : i32
    %c0_i32_0 = arith.constant 0 : i32
    return %arg0, %c0_i32 : i32, i32
  }
}

</mosaic_0001>

<llo_original>
// kernel: tpu_custom_call.1
$region0: #{tpu_custom_call.1}
  #allocation0 [shape = 'u32[]', space=smem, size = 0x4, offset = 0x4, fixed_abs, tag = 'smem constant byte address 0x4 - core index']
  #allocation1 [shape = 'u32[144,128]{1,0:T(1,128)}', space=vmem, size = 0x12000, scoped, tag = 'internal scratch']
  %s0 = inlined_call_operand.hbm [shape: bf16[16,128], index: 0, kind: input, shape index: {}]
  %s1 = inlined_call_operand.hbm [shape: bf16[128,128], index: 1, kind: input, shape index: {}]
  %s2 = inlined_call_operand.vmem [shape: f32[1,128], index: 2, kind: input, shape index: {}]
  %s3 = inlined_call_operand.hbm [shape: bf16[128,128], index: 3, kind: input, shape index: {}]
  %s4 = inlined_call_operand.vmem [shape: f32[1,128], index: 4, kind: input, shape index: {}]
  %s5 = inlined_call_operand.hbm [shape: bf16[128,128], index: 5, kind: input, shape index: {}]
  %s6 = inlined_call_operand.vmem [shape: f32[1,128], index: 6, kind: input, shape index: {}]
  %s7 = inlined_call_operand.hbm [shape: bf16[16,128], index: 7, kind: output, shape index: {}]
  %s8 = sld [smem:[#allocation0]]
  $region54: #{tpu_custom_call.1} parent=0
    _
  %s10 = ssub.s32 1, %s8
  %s11 = scalar_select 0, %s10, %s8
  $region1: #{tpu_custom_call.1} parent=0
    #allocation2 [shape = 'u8[4096]{0}', space=vmem, size = 0x1000, scoped, tag = 'input window, operand 0, single buffered']
    #allocation3 [shape = 's32[1]{0}', space=sflag, size = 0x4, scoped, tag = 'scoped memory for tpu_custom_call.1']
    #allocation4 [shape = 's32[1]{0}', space=sflag, size = 0x4, scoped, tag = 'scoped memory for tpu_custom_call.1']
    #allocation5 [shape = 'u8[32768]{0}', space=vmem, size = 0x8000, scoped, tag = 'input window, operand 1, single buffered']
    #allocation6 [shape = 's32[1]{0}', space=sflag, size = 0x4, scoped, tag = 'scoped memory for tpu_custom_call.1']
    #allocation7 [shape = 'u8[32768]{0}', space=vmem, size = 0x8000, scoped, tag = 'input window, operand 3, single buffered']
    #allocation8 [shape = 'u8[32768]{0}', space=vmem, size = 0x8000, scoped, tag = 'input window, operand 5, single buffered']
    #allocation9 [shape = 's32[1]{0}', space=sflag, size = 0x4, scoped, tag = 'scoped memory for tpu_custom_call.1']
    #allocation10 [shape = 'u8[4096]{0}', space=vmem, size = 0x1000, scoped, tag = 'output window, operand 0, single buffered']
    %12 = vsyncpa [#allocation3], 0
    %13 = vsyncpa [#allocation6], 0
    %14 = vsyncpa [#allocation9], 0
    %15 = vsyncpa [#allocation4], 0
    // Predicated region
    $region2: #{tpu_custom_call.1} parent=1 // pred_check
      _
    $region3: #{tpu_custom_call.1} parent=1 // pred_check_branch
      %17 = sbr.rel (0) target = $region5
    $region4: #{tpu_custom_call.1} parent=1 // pred_region
      %s19 = ssub.s32 128, 128
      %20 = vsyncadd [#allocation3], %s19
      %s21 = sshll.u32 [#allocation2], 4
      %s22 = int_to_ptr.vmem [resolvable:$true] %s21
      %27 = dma.hbm_to_vmem [thread:$0]  %s0, 128, %s22, [#allocation3], 64, 64, 4
    $region5: #{tpu_custom_call.1} parent=1 // pred_fallthru
      _
    // Predicated region
    $region6: #{tpu_custom_call.1} parent=1 // pred_check
      _
    $region7: #{tpu_custom_call.1} parent=1 // pred_check_branch
      %29 = sbr.rel (0) target = $region9
    $region8: #{tpu_custom_call.1} parent=1 // pred_region
      %s31 = ssub.s32 1024, 1024
      %32 = vsyncadd [#allocation6], %s31
      %s33 = sshll.u32 [#allocation5], 4
      %s34 = int_to_ptr.vmem [resolvable:$true] %s33
      %39 = dma.hbm_to_vmem [thread:$0]  %s1, 1024, %s34, [#allocation6], 64, 64, 4
    $region9: #{tpu_custom_call.1} parent=1 // pred_fallthru
      _
    // Predicated region
    $region10: #{tpu_custom_call.1} parent=1 // pred_check
      _
    $region11: #{tpu_custom_call.1} parent=1 // pred_check_branch
      %41 = sbr.rel (0) target = $region13
    $region12: #{tpu_custom_call.1} parent=1 // pred_region
      _
    $region13: #{tpu_custom_call.1} parent=1 // pred_fallthru
      _
    // Predicated region
    $region14: #{tpu_custom_call.1} parent=1 // pred_check
      _
    $region15: #{tpu_custom_call.1} parent=1 // pred_check_branch
      %43 = sbr.rel (0) target = $region17
    $region16: #{tpu_custom_call.1} parent=1 // pred_region
      %s45 = ssub.s32 1024, 1024
      %46 = vsyncadd [#allocation6], %s45
      %s47 = sshll.u32 [#allocation7], 4
      %s48 = int_to_ptr.vmem [resolvable:$true] %s47
      %53 = dma.hbm_to_vmem [thread:$0]  %s3, 1024, %s48, [#allocation6], 64, 64, 4
    $region17: #{tpu_custom_call.1} parent=1 // pred_fallthru
      _
    // Predicated region
    $region18: #{tpu_custom_call.1} parent=1 // pred_check
      _
    $region19: #{tpu_custom_call.1} parent=1 // pred_check_branch
      %55 = sbr.rel (0) target = $region21
    $region20: #{tpu_custom_call.1} parent=1 // pred_region
      _
    $region21: #{tpu_custom_call.1} parent=1 // pred_fallthru
      _
    // Predicated region
    $region22: #{tpu_custom_call.1} parent=1 // pred_check
      _
    $region23: #{tpu_custom_call.1} parent=1 // pred_check_branch
      %57 = sbr.rel (0) target = $region25
    $region24: #{tpu_custom_call.1} parent=1 // pred_region
      %s59 = ssub.s32 1024, 1024
      %60 = vsyncadd [#allocation9], %s59
      %s61 = sshll.u32 [#allocation8], 4
      %s62 = int_to_ptr.vmem [resolvable:$true] %s61
      %67 = dma.hbm_to_vmem [thread:$0]  %s5, 1024, %s62, [#allocation9], 64, 64, 4
    $region25: #{tpu_custom_call.1} parent=1 // pred_fallthru
      _
    // Predicated region
    $region26: #{tpu_custom_call.1} parent=1 // pred_check
      _
    $region27: #{tpu_custom_call.1} parent=1 // pred_check_branch
      %69 = sbr.rel (0) target = $region29
    $region28: #{tpu_custom_call.1} parent=1 // pred_region
      _
    $region29: #{tpu_custom_call.1} parent=1 // pred_fallthru
      _
    // Predicated region
    $region30: #{tpu_custom_call.1} parent=1 // pred_check
      _
    $region31: #{tpu_custom_call.1} parent=1 // pred_check_branch
      %71 = sbr.rel (0) target = $region33
    $region32: #{tpu_custom_call.1} parent=1 // pred_region
      %72 = dma.done [#allocation3], 128
    $region33: #{tpu_custom_call.1} parent=1 // pred_fallthru
      _
    // Predicated region
    $region34: #{tpu_custom_call.1} parent=1 // pred_check
      _
    $region35: #{tpu_custom_call.1} parent=1 // pred_check_branch
      %74 = sbr.rel (0) target = $region37
    $region36: #{tpu_custom_call.1} parent=1 // pred_region
      %75 = dma.done [#allocation6], 1024
    $region37: #{tpu_custom_call.1} parent=1 // pred_fallthru
      _
    // Predicated region
    $region38: #{tpu_custom_call.1} parent=1 // pred_check
      _
    $region39: #{tpu_custom_call.1} parent=1 // pred_check_branch
      %77 = sbr.rel (0) target = $region41
    $region40: #{tpu_custom_call.1} parent=1 // pred_region
      %78 = dma.done [#allocation6], 1024
    $region41: #{tpu_custom_call.1} parent=1 // pred_fallthru
      _
    // Predicated region
    $region42: #{tpu_custom_call.1} parent=1 // pred_check
      _
    $region43: #{tpu_custom_call.1} parent=1 // pred_check_branch
      %80 = sbr.rel (0) target = $region45
    $region44: #{tpu_custom_call.1} parent=1 // pred_region
      %81 = dma.done [#allocation9], 1024
    $region45: #{tpu_custom_call.1} parent=1 // pred_fallthru
      _
    %v83 = vld [vmem:[#allocation2] sm:$0xf]
    %v84 = vld [vmem:[#allocation2 + $0x4] sm:$0xf]
    %v85 = vld [vmem:[#allocation5] sm:$0xf]
    %v86 = vld [vmem:[#allocation5 + $0x4] sm:$0xf]
    %v87 = vld [vmem:[#allocation5 + $0x8] sm:$0xf]
    %v88 = vld [vmem:[#allocation5 + $0xc] sm:$0xf]
    %v89 = vld [vmem:[#allocation5 + $0x10] sm:$0xf]
    %v90 = vld [vmem:[#allocation5 + $0x14] sm:$0xf]
    %v91 = vld [vmem:[#allocation5 + $0x18] sm:$0xf]
    %v92 = vld [vmem:[#allocation5 + $0x1c] sm:$0xf]
    %v93 = vld [vmem:[#allocation5 + $0x20] sm:$0xf]
    %v94 = vld [vmem:[#allocation5 + $0x24] sm:$0xf]
    %v95 = vld [vmem:[#allocation5 + $0x28] sm:$0xf]
    %v96 = vld [vmem:[#allocation5 + $0x2c] sm:$0xf]
    %v97 = vld [vmem:[#allocation5 + $0x30] sm:$0xf]
    %v98 = vld [vmem:[#allocation5 + $0x34] sm:$0xf]
    %v99 = vld [vmem:[#allocation5 + $0x38] sm:$0xf]
    %v100 = vld [vmem:[#allocation5 + $0x3c] sm:$0xf]
    %v101 = vld [vmem:[%s2] sm:$0x1]
    %v103 = vlaneseq
    %v104 = vshrl.u32 %v103, 7
    %v105 = vsub.s32 0, %v104
    %v106 = vrot.slane %v101, %v105
    %v110 = vunpack.c.l.b16 %v83
    %v111 = vunpack.c.l.b16 %v84
    %v112 = vpack.c.b16 %v111, %v110
    %v130 = vunpack.c.l.b16 %v85
    %v131 = vunpack.c.l.b16 %v86
    %v132 = vunpack.c.l.b16 %v87
    %v133 = vunpack.c.l.b16 %v88
    %v134 = vunpack.c.l.b16 %v89
    %v135 = vunpack.c.l.b16 %v90
    %v136 = vunpack.c.l.b16 %v91
    %v137 = vunpack.c.l.b16 %v92
    %v138 = vunpack.c.l.b16 %v93
    %v139 = vunpack.c.l.b16 %v94
    %v140 = vunpack.c.l.b16 %v95
    %v141 = vunpack.c.l.b16 %v96
    %v142 = vunpack.c.l.b16 %v97
    %v143 = vunpack.c.l.b16 %v98
    %v144 = vunpack.c.l.b16 %v99
    %v145 = vunpack.c.l.b16 %v100
    %v146 = vpack.c.b16 %v131, %v130
    %v147 = vpack.c.b16 %v133, %v132
    %v148 = vpack.c.b16 %v135, %v134
    %v149 = vpack.c.b16 %v137, %v136
    %v150 = vpack.c.b16 %v139, %v138
    %v151 = vpack.c.b16 %v141, %v140
    %v152 = vpack.c.b16 %v143, %v142
    %v153 = vpack.c.b16 %v145, %v144
    %162 = vmatprep.subr.bf16.mxu0 0
    %163 = vmatpush1.bf16.msra.mxu0 %v146
    %164 = vmatprep.subr.bf16.mxu0 0
    %165 = vmatpush1.bf16.msra.mxu0 %v147
    %166 = vmatprep.subr.bf16.mxu0 0
    %167 = vmatpush1.bf16.msra.mxu0 %v148
    %168 = vmatprep.subr.bf16.mxu0 0
    %169 = vmatpush1.bf16.msra.mxu0 %v149
    %170 = vmatprep.subr.bf16.mxu0 0
    %171 = vmatpush1.bf16.msra.mxu0 %v150
    %172 = vmatprep.subr.bf16.mxu0 0
    %173 = vmatpush1.bf16.msra.mxu0 %v151
    %174 = vmatprep.subr.bf16.mxu0 0
    %175 = vmatpush1.bf16.msra.mxu0 %v152
    %176 = vmatprep.subr.bf16.mxu0 0
    %177 = vmatpush1.bf16.msra.mxu0 %v153
    %178 = vmatprep.subr.bf16.mxu0 0
    %179 = vmatpush1.bf16.msra.mxu0 0
    %180 = vmatprep.subr.bf16.mxu0 0
    %181 = vmatpush1.bf16.msra.mxu0 0
    %182 = vmatprep.subr.bf16.mxu0 0
    %183 = vmatpush1.bf16.msra.mxu0 0
    %184 = vmatprep.subr.bf16.mxu0 0
    %185 = vmatpush1.bf16.msra.mxu0 0
    %186 = vmatprep.subr.bf16.mxu0 0
    %187 = vmatpush1.bf16.msra.mxu0 0
    %188 = vmatprep.subr.bf16.mxu0 0
    %189 = vmatpush1.bf16.msra.mxu0 0
    %190 = vmatprep.subr.bf16.mxu0 0
    %191 = vmatpush1.bf16.msra.mxu0 0
    %192 = vmatprep.subr.bf16.mxu0 0
    %193 = vmatpush1.bf16.msra.mxu0 0
    %194 = vmatprep.mubr.bf16.mxu0 0
    %195 = vmatmul.mubr.bf16.gmra.mrb[0].mxu0 %v112
    %v196 = vpop.f32.mrb[0].mxu0
    %v197 = vadd.f32 %v106, %v196
    %v198 = vpop.f32.mrb[0].mxu0
    %v199 = vpop.f32.mrb[0].mxu0
    %v200 = vadd.f32 %v106, %v199
    %v201 = vpop.f32.mrb[0].mxu0
    %202 = vdwg.mxu0
    %v203 = vmax.f32 %v197, 0.0
    %v204 = vmax.f32 %v200, 0.0
    %v205 = vpack.c.bf16 %v204, %v203
    %v206 = vld [vmem:[#allocation7] sm:$0xf]
    %v207 = vld [vmem:[#allocation7 + $0x4] sm:$0xf]
    %v208 = vld [vmem:[#allocation7 + $0x8] sm:$0xf]
    %v209 = vld [vmem:[#allocation7 + $0xc] sm:$0xf]
    %v210 = vld [vmem:[#allocation7 + $0x10] sm:$0xf]
    %v211 = vld [vmem:[#allocation7 + $0x14] sm:$0xf]
    %v212 = vld [vmem:[#allocation7 + $0x18] sm:$0xf]
    %v213 = vld [vmem:[#allocation7 + $0x1c] sm:$0xf]
    %v214 = vld [vmem:[#allocation7 + $0x20] sm:$0xf]
    %v215 = vld [vmem:[#allocation7 + $0x24] sm:$0xf]
    %v216 = vld [vmem:[#allocation7 + $0x28] sm:$0xf]
    %v217 = vld [vmem:[#allocation7 + $0x2c] sm:$0xf]
    %v218 = vld [vmem:[#allocation7 + $0x30] sm:$0xf]
    %v219 = vld [vmem:[#allocation7 + $0x34] sm:$0xf]
    %v220 = vld [vmem:[#allocation7 + $0x38] sm:$0xf]
    %v221 = vld [vmem:[#allocation7 + $0x3c] sm:$0xf]
    %v222 = vld [vmem:[%s4] sm:$0x1]
    %v224 = vlaneseq
    %v225 = vshrl.u32 %v224, 7
    %v226 = vsub.s32 0, %v225
    %v227 = vrot.slane %v222, %v226
    %v245 = vunpack.c.l.b16 %v206
    %v246 = vunpack.c.l.b16 %v207
    %v247 = vunpack.c.l.b16 %v208
    %v248 = vunpack.c.l.b16 %v209
    %v249 = vunpack.c.l.b16 %v210
    %v250 = vunpack.c.l.b16 %v211
    %v251 = vunpack.c.l.b16 %v212
    %v252 = vunpack.c.l.b16 %v213
    %v253 = vunpack.c.l.b16 %v214
    %v254 = vunpack.c.l.b16 %v215
    %v255 = vunpack.c.l.b16 %v216
    %v256 = vunpack.c.l.b16 %v217
    %v257 = vunpack.c.l.b16 %v218
    %v258 = vunpack.c.l.b16 %v219
    %v259 = vunpack.c.l.b16 %v220
    %v260 = vunpack.c.l.b16 %v221
    %v261 = vpack.c.b16 %v246, %v245
    %v262 = vpack.c.b16 %v248, %v247
    %v263 = vpack.c.b16 %v250, %v249
    %v264 = vpack.c.b16 %v252, %v251
    %v265 = vpack.c.b16 %v254, %v253
    %v266 = vpack.c.b16 %v256, %v255
    %v267 = vpack.c.b16 %v258, %v257
    %v268 = vpack.c.b16 %v260, %v259
    %277 = vmatprep.subr.bf16.mxu0 0
    %278 = vmatpush1.bf16.msra.mxu0 %v261
    %279 = vmatprep.subr.bf16.mxu0 0
    %280 = vmatpush1.bf16.msra.mxu0 %v262
    %281 = vmatprep.subr.bf16.mxu0 0
    %282 = vmatpush1.bf16.msra.mxu0 %v263
    %283 = vmatprep.subr.bf16.mxu0 0
    %284 = vmatpush1.bf16.msra.mxu0 %v264
    %285 = vmatprep.subr.bf16.mxu0 0
    %286 = vmatpush1.bf16.msra.mxu0 %v265
    %287 = vmatprep.subr.bf16.mxu0 0
    %288 = vmatpush1.bf16.msra.mxu0 %v266
    %289 = vmatprep.subr.bf16.mxu0 0
    %290 = vmatpush1.bf16.msra.mxu0 %v267
    %291 = vmatprep.subr.bf16.mxu0 0
    %292 = vmatpush1.bf16.msra.mxu0 %v268
    %293 = vmatprep.subr.bf16.mxu0 0
    %294 = vmatpush1.bf16.msra.mxu0 0
    %295 = vmatprep.subr.bf16.mxu0 0
    %296 = vmatpush1.bf16.msra.mxu0 0
    %297 = vmatprep.subr.bf16.mxu0 0
    %298 = vmatpush1.bf16.msra.mxu0 0
    %299 = vmatprep.subr.bf16.mxu0 0
    %300 = vmatpush1.bf16.msra.mxu0 0
    %301 = vmatprep.subr.bf16.mxu0 0
    %302 = vmatpush1.bf16.msra.mxu0 0
    %303 = vmatprep.subr.bf16.mxu0 0
    %304 = vmatpush1.bf16.msra.mxu0 0
    %305 = vmatprep.subr.bf16.mxu0 0
    %306 = vmatpush1.bf16.msra.mxu0 0
    %307 = vmatprep.subr.bf16.mxu0 0
    %308 = vmatpush1.bf16.msra.mxu0 0
    %309 = vmatprep.mubr.bf16.mxu0 0
    %310 = vmatmul.mubr.bf16.gmra.mrb[0].mxu0 %v205
    %v311 = vpop.f32.mrb[0].mxu0
    %v312 = vadd.f32 %v227, %v311
    %v313 = vpop.f32.mrb[0].mxu0
    %v314 = vpop.f32.mrb[0].mxu0
    %v315 = vadd.f32 %v227, %v314
    %v316 = vpop.f32.mrb[0].mxu0
    %317 = vdwg.mxu0
    %v318 = vmax.f32 %v312, 0.0
    %v319 = vmax.f32 %v315, 0.0
    %v320 = vpack.c.bf16 %v319, %v318
    %v321 = vld [vmem:[#allocation8] sm:$0xf]
    %v322 = vld [vmem:[#allocation8 + $0x4] sm:$0xf]
    %v323 = vld [vmem:[#allocation8 + $0x8] sm:$0xf]
    %v324 = vld [vmem:[#allocation8 + $0xc] sm:$0xf]
    %v325 = vld [vmem:[#allocation8 + $0x10] sm:$0xf]
    %v326 = vld [vmem:[#allocation8 + $0x14] sm:$0xf]
    %v327 = vld [vmem:[#allocation8 + $0x18] sm:$0xf]
    %v328 = vld [vmem:[#allocation8 + $0x1c] sm:$0xf]
    %v329 = vld [vmem:[#allocation8 + $0x20] sm:$0xf]
    %v330 = vld [vmem:[#allocation8 + $0x24] sm:$0xf]
    %v331 = vld [vmem:[#allocation8 + $0x28] sm:$0xf]
    %v332 = vld [vmem:[#allocation8 + $0x2c] sm:$0xf]
    %v333 = vld [vmem:[#allocation8 + $0x30] sm:$0xf]
    %v334 = vld [vmem:[#allocation8 + $0x34] sm:$0xf]
    %v335 = vld [vmem:[#allocation8 + $0x38] sm:$0xf]
    %v336 = vld [vmem:[#allocation8 + $0x3c] sm:$0xf]
    %v337 = vld [vmem:[%s6] sm:$0x1]
    %v339 = vlaneseq
    %v340 = vshrl.u32 %v339, 7
    %v341 = vsub.s32 0, %v340
    %v342 = vrot.slane %v337, %v341
    %v360 = vunpack.c.l.b16 %v321
    %v361 = vunpack.c.l.b16 %v322
    %v362 = vunpack.c.l.b16 %v323
    %v363 = vunpack.c.l.b16 %v324
    %v364 = vunpack.c.l.b16 %v325
    %v365 = vunpack.c.l.b16 %v326
    %v366 = vunpack.c.l.b16 %v327
    %v367 = vunpack.c.l.b16 %v328
    %v368 = vunpack.c.l.b16 %v329
    %v369 = vunpack.c.l.b16 %v330
    %v370 = vunpack.c.l.b16 %v331
    %v371 = vunpack.c.l.b16 %v332
    %v372 = vunpack.c.l.b16 %v333
    %v373 = vunpack.c.l.b16 %v334
    %v374 = vunpack.c.l.b16 %v335
    %v375 = vunpack.c.l.b16 %v336
    %v376 = vpack.c.b16 %v361, %v360
    %v377 = vpack.c.b16 %v363, %v362
    %v378 = vpack.c.b16 %v365, %v364
    %v379 = vpack.c.b16 %v367, %v366
    %v380 = vpack.c.b16 %v369, %v368
    %v381 = vpack.c.b16 %v371, %v370
    %v382 = vpack.c.b16 %v373, %v372
    %v383 = vpack.c.b16 %v375, %v374
    %392 = vmatprep.subr.bf16.mxu0 0
    %393 = vmatpush1.bf16.msra.mxu0 %v376
    %394 = vmatprep.subr.bf16.mxu0 0
    %395 = vmatpush1.bf16.msra.mxu0 %v377
    %396 = vmatprep.subr.bf16.mxu0 0
    %397 = vmatpush1.bf16.msra.mxu0 %v378
    %398 = vmatprep.subr.bf16.mxu0 0
    %399 = vmatpush1.bf16.msra.mxu0 %v379
    %400 = vmatprep.subr.bf16.mxu0 0
    %401 = vmatpush1.bf16.msra.mxu0 %v380
    %402 = vmatprep.subr.bf16.mxu0 0
    %403 = vmatpush1.bf16.msra.mxu0 %v381
    %404 = vmatprep.subr.bf16.mxu0 0
    %405 = vmatpush1.bf16.msra.mxu0 %v382
    %406 = vmatprep.subr.bf16.mxu0 0
    %407 = vmatpush1.bf16.msra.mxu0 %v383
    %408 = vmatprep.subr.bf16.mxu0 0
    %409 = vmatpush1.bf16.msra.mxu0 0
    %410 = vmatprep.subr.bf16.mxu0 0
    %411 = vmatpush1.bf16.msra.mxu0 0
    %412 = vmatprep.subr.bf16.mxu0 0
    %413 = vmatpush1.bf16.msra.mxu0 0
    %414 = vmatprep.subr.bf16.mxu0 0
    %415 = vmatpush1.bf16.msra.mxu0 0
    %416 = vmatprep.subr.bf16.mxu0 0
    %417 = vmatpush1.bf16.msra.mxu0 0
    %418 = vmatprep.subr.bf16.mxu0 0
    %419 = vmatpush1.bf16.msra.mxu0 0
    %420 = vmatprep.subr.bf16.mxu0 0
    %421 = vmatpush1.bf16.msra.mxu0 0
    %422 = vmatprep.subr.bf16.mxu0 0
    %423 = vmatpush1.bf16.msra.mxu0 0
    %424 = vmatprep.mubr.bf16.mxu0 0
    %425 = vmatmul.mubr.bf16.gmra.mrb[0].mxu0 %v320
    %v426 = vpop.f32.mrb[0].mxu0
    %v427 = vadd.f32 %v342, %v426
    %v428 = vpop.f32.mrb[0].mxu0
    %v429 = vpop.f32.mrb[0].mxu0
    %v430 = vadd.f32 %v342, %v429
    %v431 = vpop.f32.mrb[0].mxu0
    %432 = vdwg.mxu0
    %v433 = vpack.c.bf16 %v430, %v427
    %v435 = vunpack.c.l.b16 %v433
    %v436 = vunpack.c.h.b16 %v433
    %v437 = vpack.c.b16 %v435, %v435
    %v438 = vpack.c.b16 %v436, %v436
    %441 = vst [vmem:[#allocation10] sm:$0xf] %v437
    %442 = vst [vmem:[#allocation10 + $0x4] sm:$0xf] %v438
    // Predicated region
    $region46: #{tpu_custom_call.1} parent=1 // pred_check
      _
    $region47: #{tpu_custom_call.1} parent=1 // pred_check_branch
      %444 = sbr.rel (0) target = $region49
    $region48: #{tpu_custom_call.1} parent=1 // pred_region
      %s446 = ssub.s32 128, 128
      %447 = vsyncadd [#allocation4], %s446
      %s448 = sshll.u32 [#allocation10], 4
      %s449 = int_to_ptr.vmem [resolvable:$true] %s448
      %454 = dma.vmem_to_hbm [thread:$0]  %s449, 128, %s7, [#allocation4], 64, 64, 4
    $region49: #{tpu_custom_call.1} parent=1 // pred_fallthru
      _
    // Predicated region
    $region50: #{tpu_custom_call.1} parent=1 // pred_check
      _
    $region51: #{tpu_custom_call.1} parent=1 // pred_check_branch
      %456 = sbr.rel (0) target = $region53
    $region52: #{tpu_custom_call.1} parent=1 // pred_region
      %457 = dma.done [#allocation4], 128
    $region53: #{tpu_custom_call.1} parent=1 // pred_fallthru
      _
    %458 = vsyncpa [#allocation3], 1
    %459 = vsyncpa [#allocation6], 1
    %460 = vsyncpa [#allocation9], 1
    %461 = vsyncpa [#allocation4], 1

// kernel: tpu_custom_call.1
$region0: #{tpu_custom_call.1}
  #allocation0 [shape = 'u32[]', space=smem, size = 0x4, offset = 0x4, fixed_abs, tag = 'smem constant byte address 0x4 - core index']
  #allocation1 [shape = 'u32[144,128]{1,0:T(1,128)}', space=vmem, size = 0x12000, scoped, tag = 'internal scratch']
  %s0 = inlined_call_operand.hbm [shape: bf16[16,128], index: 0, kind: input, shape index: {}]
  %s1 = inlined_call_operand.hbm [shape: bf16[128,128], index: 1, kind: input, shape index: {}]
  %s2 = inlined_call_operand.vmem [shape: f32[1,128], index: 2, kind: input, shape index: {}]
  %s3 = inlined_call_operand.hbm [shape: bf16[128,128], index: 3, kind: input, shape index: {}]
  %s4 = inlined_call_operand.vmem [shape: f32[1,128], index: 4, kind: input, shape index: {}]
  %s5 = inlined_call_operand.hbm [shape: bf16[128,128], index: 5, kind: input, shape index: {}]
  %s6 = inlined_call_operand.vmem [shape: f32[1,128], index: 6, kind: input, shape index: {}]
  %s7 = inlined_call_operand.hbm [shape: bf16[16,128], index: 7, kind: output, shape index: {}]
  %s8 = sld [smem:[#allocation0]]
  $region54: #{tpu_custom_call.1} parent=0
    _
  %s10 = ssub.s32 1, %s8
  %s11 = scalar_select 0, %s10, %s8
  $region1: #{tpu_custom_call.1} parent=0
    #allocation2 [shape = 'u8[4096]{0}', space=vmem, size = 0x1000, scoped, tag = 'input window, operand 0, single buffered']
    #allocation3 [shape = 's32[1]{0}', space=sflag, size = 0x4, scoped, tag = 'scoped memory for tpu_custom_call.1']
    #allocation4 [shape = 's32[1]{0}', space=sflag, size = 0x4, scoped, tag = 'scoped memory for tpu_custom_call.1']
    #allocation5 [shape = 'u8[32768]{0}', space=vmem, size = 0x8000, scoped, tag = 'input window, operand 1, single buffered']
    #allocation6 [shape = 's32[1]{0}', space=sflag, size = 0x4, scoped, tag = 'scoped memory for tpu_custom_call.1']
    #allocation7 [shape = 'u8[32768]{0}', space=vmem, size = 0x8000, scoped, tag = 'input window, operand 3, single buffered']
    #allocation8 [shape = 'u8[32768]{0}', space=vmem, size = 0x8000, scoped, tag = 'input window, operand 5, single buffered']
    #allocation9 [shape = 's32[1]{0}', space=sflag, size = 0x4, scoped, tag = 'scoped memory for tpu_custom_call.1']
    #allocation10 [shape = 'u8[4096]{0}', space=vmem, size = 0x1000, scoped, tag = 'output window, operand 0, single buffered']
    %12 = vsyncpa [#allocation3], 0
    %13 = vsyncpa [#allocation6], 0
    %14 = vsyncpa [#allocation9], 0
    %15 = vsyncpa [#allocation4], 0
    // Predicated region
    $region2: #{tpu_custom_call.1} parent=1 // pred_check
      _
    $region3: #{tpu_custom_call.1} parent=1 // pred_check_branch
      %17 = sbr.rel (0) target = $region5
    $region4: #{tpu_custom_call.1} parent=1 // pred_region
      %s19 = ssub.s32 128, 128
      %20 = vsyncadd [#allocation3], %s19
      %s21 = sshll.u32 [#allocation2], 4
      %s22 = int_to_ptr.vmem [resolvable:$true] %s21
      %27 = dma.hbm_to_vmem [thread:$0]  %s0, 128, %s22, [#allocation3], 64, 64, 4
    $region5: #{tpu_custom_call.1} parent=1 // pred_fallthru
      _
    // Predicated region
    $region6: #{tpu_custom_call.1} parent=1 // pred_check
      _
    $region7: #{tpu_custom_call.1} parent=1 // pred_check_branch
      %29 = sbr.rel (0) target = $region9
    $region8: #{tpu_custom_call.1} parent=1 // pred_region
      %s31 = ssub.s32 1024, 1024
      %32 = vsyncadd [#allocation6], %s31
      %s33 = sshll.u32 [#allocation5], 4
      %s34 = int_to_ptr.vmem [resolvable:$true] %s33
      %39 = dma.hbm_to_vmem [thread:$0]  %s1, 1024, %s34, [#allocation6], 64, 64, 4
    $region9: #{tpu_custom_call.1} parent=1 // pred_fallthru
      _
    // Predicated region
    $region10: #{tpu_custom_call.1} parent=1 // pred_check
      _
    $region11: #{tpu_custom_call.1} parent=1 // pred_check_branch
      %41 = sbr.rel (0) target = $region13
    $region12: #{tpu_custom_call.1} parent=1 // pred_region
      _
    $region13: #{tpu_custom_call.1} parent=1 // pred_fallthru
      _
    // Predicated region
    $region14: #{tpu_custom_call.1} parent=1 // pred_check
      _
    $region15: #{tpu_custom_call.1} parent=1 // pred_check_branch
      %43 = sbr.rel (0) target = $region17
    $region16: #{tpu_custom_call.1} parent=1 // pred_region
      %s45 = ssub.s32 1024, 1024
      %46 = vsyncadd [#allocation6], %s45
      %s47 = sshll.u32 [#allocation7], 4
      %s48 = int_to_ptr.vmem [resolvable:$true] %s47
      %53 = dma.hbm_to_vmem [thread:$0]  %s3, 1024, %s48, [#allocation6], 64, 64, 4
    $region17: #{tpu_custom_call.1} parent=1 // pred_fallthru
      _
    // Predicated region
    $region18: #{tpu_custom_call.1} parent=1 // pred_check
      _
    $region19: #{tpu_custom_call.1} parent=1 // pred_check_branch
      %55 = sbr.rel (0) target = $region21
    $region20: #{tpu_custom_call.1} parent=1 // pred_region
      _
    $region21: #{tpu_custom_call.1} parent=1 // pred_fallthru
      _
    // Predicated region
    $region22: #{tpu_custom_call.1} parent=1 // pred_check
      _
    $region23: #{tpu_custom_call.1} parent=1 // pred_check_branch
      %57 = sbr.rel (0) target = $region25
    $region24: #{tpu_custom_call.1} parent=1 // pred_region
      %s59 = ssub.s32 1024, 1024
      %60 = vsyncadd [#allocation9], %s59
      %s61 = sshll.u32 [#allocation8], 4
      %s62 = int_to_ptr.vmem [resolvable:$true] %s61
      %67 = dma.hbm_to_vmem [thread:$0]  %s5, 1024, %s62, [#allocation9], 64, 64, 4
    $region25: #{tpu_custom_call.1} parent=1 // pred_fallthru
      _
    // Predicated region
    $region26: #{tpu_custom_call.1} parent=1 // pred_check
      _
    $region27: #{tpu_custom_call.1} parent=1 // pred_check_branch
      %69 = sbr.rel (0) target = $region29
    $region28: #{tpu_custom_call.1} parent=1 // pred_region
      _
    $region29: #{tpu_custom_call.1} parent=1 // pred_fallthru
      _
    // Predicated region
    $region30: #{tpu_custom_call.1} parent=1 // pred_check
      _
    $region31: #{tpu_custom_call.1} parent=1 // pred_check_branch
      %71 = sbr.rel (0) target = $region33
    $region32: #{tpu_custom_call.1} parent=1 // pred_region
      %72 = dma.done [#allocation3], 128
    $region33: #{tpu_custom_call.1} parent=1 // pred_fallthru
      _
    // Predicated region
    $region34: #{tpu_custom_call.1} parent=1 // pred_check
      _
    $region35: #{tpu_custom_call.1} parent=1 // pred_check_branch
      %74 = sbr.rel (0) target = $region37
    $region36: #{tpu_custom_call.1} parent=1 // pred_region
      %75 = dma.done [#allocation6], 1024
    $region37: #{tpu_custom_call.1} parent=1 // pred_fallthru
      _
    // Predicated region
    $region38: #{tpu_custom_call.1} parent=1 // pred_check
      _
    $region39: #{tpu_custom_call.1} parent=1 // pred_check_branch
      %77 = sbr.rel (0) target = $region41
    $region40: #{tpu_custom_call.1} parent=1 // pred_region
      %78 = dma.done [#allocation6], 1024
    $region41: #{tpu_custom_call.1} parent=1 // pred_fallthru
      _
    // Predicated region
    $region42: #{tpu_custom_call.1} parent=1 // pred_check
      _
    $region43: #{tpu_custom_call.1} parent=1 // pred_check_branch
      %80 = sbr.rel (0) target = $region45
    $region44: #{tpu_custom_call.1} parent=1 // pred_region
      %81 = dma.done [#allocation9], 1024
    $region45: #{tpu_custom_call.1} parent=1 // pred_fallthru
      _
    %v83 = vld [vmem:[#allocation2] sm:$0xf]
    %v84 = vld [vmem:[#allocation2 + $0x4] sm:$0xf]
    %v85 = vld [vmem:[#allocation5] sm:$0xf]
    %v86 = vld [vmem:[#allocation5 + $0x4] sm:$0xf]
    %v87 = vld [vmem:[#allocation5 + $0x8] sm:$0xf]
    %v88 = vld [vmem:[#allocation5 + $0xc] sm:$0xf]
    %v89 = vld [vmem:[#allocation5 + $0x10] sm:$0xf]
    %v90 = vld [vmem:[#allocation5 + $0x14] sm:$0xf]
    %v91 = vld [vmem:[#allocation5 + $0x18] sm:$0xf]
    %v92 = vld [vmem:[#allocation5 + $0x1c] sm:$0xf]
    %v93 = vld [vmem:[#allocation5 + $0x20] sm:$0xf]
    %v94 = vld [vmem:[#allocation5 + $0x24] sm:$0xf]
    %v95 = vld [vmem:[#allocation5 + $0x28] sm:$0xf]
    %v96 = vld [vmem:[#allocation5 + $0x2c] sm:$0xf]
    %v97 = vld [vmem:[#allocation5 + $0x30] sm:$0xf]
    %v98 = vld [vmem:[#allocation5 + $0x34] sm:$0xf]
    %v99 = vld [vmem:[#allocation5 + $0x38] sm:$0xf]
    %v100 = vld [vmem:[#allocation5 + $0x3c] sm:$0xf]
    %v101 = vld [vmem:[%s2] sm:$0x1]
    %v103 = vlaneseq
    %v104 = vshrl.u32 %v103, 7
    %v105 = vsub.s32 0, %v104
    %v106 = vrot.slane %v101, %v105
    %v110 = vunpack.c.l.b16 %v83
    %v111 = vunpack.c.l.b16 %v84
    %v112 = vpack.c.b16 %v111, %v110
    %v130 = vunpack.c.l.b16 %v85
    %v131 = vunpack.c.l.b16 %v86
    %v132 = vunpack.c.l.b16 %v87
    %v133 = vunpack.c.l.b16 %v88
    %v134 = vunpack.c.l.b16 %v89
    %v135 = vunpack.c.l.b16 %v90
    %v136 = vunpack.c.l.b16 %v91
    %v137 = vunpack.c.l.b16 %v92
    %v138 = vunpack.c.l.b16 %v93
    %v139 = vunpack.c.l.b16 %v94
    %v140 = vunpack.c.l.b16 %v95
    %v141 = vunpack.c.l.b16 %v96
    %v142 = vunpack.c.l.b16 %v97
    %v143 = vunpack.c.l.b16 %v98
    %v144 = vunpack.c.l.b16 %v99
    %v145 = vunpack.c.l.b16 %v100
    %v146 = vpack.c.b16 %v131, %v130
    %v147 = vpack.c.b16 %v133, %v132
    %v148 = vpack.c.b16 %v135, %v134
    %v149 = vpack.c.b16 %v137, %v136
    %v150 = vpack.c.b16 %v139, %v138
    %v151 = vpack.c.b16 %v141, %v140
    %v152 = vpack.c.b16 %v143, %v142
    %v153 = vpack.c.b16 %v145, %v144
    %162 = vmatprep.subr.bf16.mxu0 0
    %163 = vmatpush1.bf16.msra.mxu0 %v146
    %164 = vmatprep.subr.bf16.mxu0 0
    %165 = vmatpush1.bf16.msra.mxu0 %v147
    %166 = vmatprep.subr.bf16.mxu0 0
    %167 = vmatpush1.bf16.msra.mxu0 %v148
    %168 = vmatprep.subr.bf16.mxu0 0
    %169 = vmatpush1.bf16.msra.mxu0 %v149
    %170 = vmatprep.subr.bf16.mxu0 0
    %171 = vmatpush1.bf16.msra.mxu0 %v150
    %172 = vmatprep.subr.bf16.mxu0 0
    %173 = vmatpush1.bf16.msra.mxu0 %v151
    %174 = vmatprep.subr.bf16.mxu0 0
    %175 = vmatpush1.bf16.msra.mxu0 %v152
    %176 = vmatprep.subr.bf16.mxu0 0
    %177 = vmatpush1.bf16.msra.mxu0 %v153
    %178 = vmatprep.subr.bf16.mxu0 0
    %179 = vmatpush1.bf16.msra.mxu0 0
    %180 = vmatprep.subr.bf16.mxu0 0
    %181 = vmatpush1.bf16.msra.mxu0 0
    %182 = vmatprep.subr.bf16.mxu0 0
    %183 = vmatpush1.bf16.msra.mxu0 0
    %184 = vmatprep.subr.bf16.mxu0 0
    %185 = vmatpush1.bf16.msra.mxu0 0
    %186 = vmatprep.subr.bf16.mxu0 0
    %187 = vmatpush1.bf16.msra.mxu0 0
    %188 = vmatprep.subr.bf16.mxu0 0
    %189 = vmatpush1.bf16.msra.mxu0 0
    %190 = vmatprep.subr.bf16.mxu0 0
    %191 = vmatpush1.bf16.msra.mxu0 0
    %192 = vmatprep.subr.bf16.mxu0 0
    %193 = vmatpush1.bf16.msra.mxu0 0
    %194 = vmatprep.mubr.bf16.mxu0 0
    %195 = vmatmul.mubr.bf16.gmra.mrb[0].mxu0 %v112
    %v196 = vpop.f32.mrb[0].mxu0
    %v197 = vadd.f32 %v106, %v196
    %v198 = vpop.f32.mrb[0].mxu0
    %v199 = vpop.f32.mrb[0].mxu0
    %v200 = vadd.f32 %v106, %v199
    %v201 = vpop.f32.mrb[0].mxu0
    %202 = vdwg.mxu0
    %v203 = vmax.f32 %v197, 0.0
    %v204 = vmax.f32 %v200, 0.0
    %v205 = vpack.c.bf16 %v204, %v203
    %v206 = vld [vmem:[#allocation7] sm:$0xf]
    %v207 = vld [vmem:[#allocation7 + $0x4] sm:$0xf]
    %v208 = vld [vmem:[#allocation7 + $0x8] sm:$0xf]
    %v209 = vld [vmem:[#allocation7 + $0xc] sm:$0xf]
    %v210 = vld [vmem:[#allocation7 + $0x10] sm:$0xf]
    %v211 = vld [vmem:[#allocation7 + $0x14] sm:$0xf]
    %v212 = vld [vmem:[#allocation7 + $0x18] sm:$0xf]
    %v213 = vld [vmem:[#allocation7 + $0x1c] sm:$0xf]
    %v214 = vld [vmem:[#allocation7 + $0x20] sm:$0xf]
    %v215 = vld [vmem:[#allocation7 + $0x24] sm:$0xf]
    %v216 = vld [vmem:[#allocation7 + $0x28] sm:$0xf]
    %v217 = vld [vmem:[#allocation7 + $0x2c] sm:$0xf]
    %v218 = vld [vmem:[#allocation7 + $0x30] sm:$0xf]
    %v219 = vld [vmem:[#allocation7 + $0x34] sm:$0xf]
    %v220 = vld [vmem:[#allocation7 + $0x38] sm:$0xf]
    %v221 = vld [vmem:[#allocation7 + $0x3c] sm:$0xf]
    %v222 = vld [vmem:[%s4] sm:$0x1]
    %v224 = vlaneseq
    %v225 = vshrl.u32 %v224, 7
    %v226 = vsub.s32 0, %v225
    %v227 = vrot.slane %v222, %v226
    %v245 = vunpack.c.l.b16 %v206
    %v246 = vunpack.c.l.b16 %v207
    %v247 = vunpack.c.l.b16 %v208
    %v248 = vunpack.c.l.b16 %v209
    %v249 = vunpack.c.l.b16 %v210
    %v250 = vunpack.c.l.b16 %v211
    %v251 = vunpack.c.l.b16 %v212
    %v252 = vunpack.c.l.b16 %v213
    %v253 = vunpack.c.l.b16 %v214
    %v254 = vunpack.c.l.b16 %v215
    %v255 = vunpack.c.l.b16 %v216
    %v256 = vunpack.c.l.b16 %v217
    %v257 = vunpack.c.l.b16 %v218
    %v258 = vunpack.c.l.b16 %v219
    %v259 = vunpack.c.l.b16 %v220
    %v260 = vunpack.c.l.b16 %v221
    %v261 = vpack.c.b16 %v246, %v245
    %v262 = vpack.c.b16 %v248, %v247
    %v263 = vpack.c.b16 %v250, %v249
    %v264 = vpack.c.b16 %v252, %v251
    %v265 = vpack.c.b16 %v254, %v253
    %v266 = vpack.c.b16 %v256, %v255
    %v267 = vpack.c.b16 %v258, %v257
    %v268 = vpack.c.b16 %v260, %v259
    %277 = vmatprep.subr.bf16.mxu0 0
    %278 = vmatpush1.bf16.msra.mxu0 %v261
    %279 = vmatprep.subr.bf16.mxu0 0
    %280 = vmatpush1.bf16.msra.mxu0 %v262
    %281 = vmatprep.subr.bf16.mxu0 0
    %282 = vmatpush1.bf16.msra.mxu0 %v263
    %283 = vmatprep.subr.bf16.mxu0 0
    %284 = vmatpush1.bf16.msra.mxu0 %v264
    %285 = vmatprep.subr.bf16.mxu0 0
    %286 = vmatpush1.bf16.msra.mxu0 %v265
    %287 = vmatprep.subr.bf16.mxu0 0
    %288 = vmatpush1.bf16.msra.mxu0 %v266
    %289 = vmatprep.subr.bf16.mxu0 0
    %290 = vmatpush1.bf16.msra.mxu0 %v267
    %291 = vmatprep.subr.bf16.mxu0 0
    %292 = vmatpush1.bf16.msra.mxu0 %v268
    %293 = vmatprep.subr.bf16.mxu0 0
    %294 = vmatpush1.bf16.msra.mxu0 0
    %295 = vmatprep.subr.bf16.mxu0 0
    %296 = vmatpush1.bf16.msra.mxu0 0
    %297 = vmatprep.subr.bf16.mxu0 0
    %298 = vmatpush1.bf16.msra.mxu0 0
    %299 = vmatprep.subr.bf16.mxu0 0
    %300 = vmatpush1.bf16.msra.mxu0 0
    %301 = vmatprep.subr.bf16.mxu0 0
    %302 = vmatpush1.bf16.msra.mxu0 0
    %303 = vmatprep.subr.bf16.mxu0 0
    %304 = vmatpush1.bf16.msra.mxu0 0
    %305 = vmatprep.subr.bf16.mxu0 0
    %306 = vmatpush1.bf16.msra.mxu0 0
    %307 = vmatprep.subr.bf16.mxu0 0
    %308 = vmatpush1.bf16.msra.mxu0 0
    %309 = vmatprep.mubr.bf16.mxu0 0
    %310 = vmatmul.mubr.bf16.gmra.mrb[0].mxu0 %v205
    %v311 = vpop.f32.mrb[0].mxu0
    %v312 = vadd.f32 %v227, %v311
    %v313 = vpop.f32.mrb[0].mxu0
    %v314 = vpop.f32.mrb[0].mxu0
    %v315 = vadd.f32 %v227, %v314
    %v316 = vpop.f32.mrb[0].mxu0
    %317 = vdwg.mxu0
    %v318 = vmax.f32 %v312, 0.0
    %v319 = vmax.f32 %v315, 0.0
    %v320 = vpack.c.bf16 %v319, %v318
    %v321 = vld [vmem:[#allocation8] sm:$0xf]
    %v322 = vld [vmem:[#allocation8 + $0x4] sm:$0xf]
    %v323 = vld [vmem:[#allocation8 + $0x8] sm:$0xf]
    %v324 = vld [vmem:[#allocation8 + $0xc] sm:$0xf]
    %v325 = vld [vmem:[#allocation8 + $0x10] sm:$0xf]
    %v326 = vld [vmem:[#allocation8 + $0x14] sm:$0xf]
    %v327 = vld [vmem:[#allocation8 + $0x18] sm:$0xf]
    %v328 = vld [vmem:[#allocation8 + $0x1c] sm:$0xf]
    %v329 = vld [vmem:[#allocation8 + $0x20] sm:$0xf]
    %v330 = vld [vmem:[#allocation8 + $0x24] sm:$0xf]
    %v331 = vld [vmem:[#allocation8 + $0x28] sm:$0xf]
    %v332 = vld [vmem:[#allocation8 + $0x2c] sm:$0xf]
    %v333 = vld [vmem:[#allocation8 + $0x30] sm:$0xf]
    %v334 = vld [vmem:[#allocation8 + $0x34] sm:$0xf]
    %v335 = vld [vmem:[#allocation8 + $0x38] sm:$0xf]
    %v336 = vld [vmem:[#allocation8 + $0x3c] sm:$0xf]
    %v337 = vld [vmem:[%s6] sm:$0x1]
    %v339 = vlaneseq
    %v340 = vshrl.u32 %v339, 7
    %v341 = vsub.s32 0, %v340
    %v342 = vrot.slane %v337, %v341
    %v360 = vunpack.c.l.b16 %v321
    %v361 = vunpack.c.l.b16 %v322
    %v362 = vunpack.c.l.b16 %v323
    %v363 = vunpack.c.l.b16 %v324
    %v364 = vunpack.c.l.b16 %v325
    %v365 = vunpack.c.l.b16 %v326
    %v366 = vunpack.c.l.b16 %v327
    %v367 = vunpack.c.l.b16 %v328
    %v368 = vunpack.c.l.b16 %v329
    %v369 = vunpack.c.l.b16 %v330
    %v370 = vunpack.c.l.b16 %v331
    %v371 = vunpack.c.l.b16 %v332
    %v372 = vunpack.c.l.b16 %v333
    %v373 = vunpack.c.l.b16 %v334
    %v374 = vunpack.c.l.b16 %v335
    %v375 = vunpack.c.l.b16 %v336
    %v376 = vpack.c.b16 %v361, %v360
    %v377 = vpack.c.b16 %v363, %v362
    %v378 = vpack.c.b16 %v365, %v364
    %v379 = vpack.c.b16 %v367, %v366
    %v380 = vpack.c.b16 %v369, %v368
    %v381 = vpack.c.b16 %v371, %v370
    %v382 = vpack.c.b16 %v373, %v372
    %v383 = vpack.c.b16 %v375, %v374
    %392 = vmatprep.subr.bf16.mxu0 0
    %393 = vmatpush1.bf16.msra.mxu0 %v376
    %394 = vmatprep.subr.bf16.mxu0 0
    %395 = vmatpush1.bf16.msra.mxu0 %v377
    %396 = vmatprep.subr.bf16.mxu0 0
    %397 = vmatpush1.bf16.msra.mxu0 %v378
    %398 = vmatprep.subr.bf16.mxu0 0
    %399 = vmatpush1.bf16.msra.mxu0 %v379
    %400 = vmatprep.subr.bf16.mxu0 0
    %401 = vmatpush1.bf16.msra.mxu0 %v380
    %402 = vmatprep.subr.bf16.mxu0 0
    %403 = vmatpush1.bf16.msra.mxu0 %v381
    %404 = vmatprep.subr.bf16.mxu0 0
    %405 = vmatpush1.bf16.msra.mxu0 %v382
    %406 = vmatprep.subr.bf16.mxu0 0
    %407 = vmatpush1.bf16.msra.mxu0 %v383
    %408 = vmatprep.subr.bf16.mxu0 0
    %409 = vmatpush1.bf16.msra.mxu0 0
    %410 = vmatprep.subr.bf16.mxu0 0
    %411 = vmatpush1.bf16.msra.mxu0 0
    %412 = vmatprep.subr.bf16.mxu0 0
    %413 = vmatpush1.bf16.msra.mxu0 0
    %414 = vmatprep.subr.bf16.mxu0 0
    %415 = vmatpush1.bf16.msra.mxu0 0
    %416 = vmatprep.subr.bf16.mxu0 0
    %417 = vmatpush1.bf16.msra.mxu0 0
    %418 = vmatprep.subr.bf16.mxu0 0
    %419 = vmatpush1.bf16.msra.mxu0 0
    %420 = vmatprep.subr.bf16.mxu0 0
    %421 = vmatpush1.bf16.msra.mxu0 0
    %422 = vmatprep.subr.bf16.mxu0 0
    %423 = vmatpush1.bf16.msra.mxu0 0
    %424 = vmatprep.mubr.bf16.mxu0 0
    %425 = vmatmul.mubr.bf16.gmra.mrb[0].mxu0 %v320
    %v426 = vpop.f32.mrb[0].mxu0
    %v427 = vadd.f32 %v342, %v426
    %v428 = vpop.f32.mrb[0].mxu0
    %v429 = vpop.f32.mrb[0].mxu0
    %v430 = vadd.f32 %v342, %v429
    %v431 = vpop.f32.mrb[0].mxu0
    %432 = vdwg.mxu0
    %v433 = vpack.c.bf16 %v430, %v427
    %v435 = vunpack.c.l.b16 %v433
    %v436 = vunpack.c.h.b16 %v433
    %v437 = vpack.c.b16 %v435, %v435
    %v438 = vpack.c.b16 %v436, %v436
    %441 = vst [vmem:[#allocation10] sm:$0xf] %v437
    %442 = vst [vmem:[#allocation10 + $0x4] sm:$0xf] %v438
    // Predicated region
    $region46: #{tpu_custom_call.1} parent=1 // pred_check
      _
    $region47: #{tpu_custom_call.1} parent=1 // pred_check_branch
      %444 = sbr.rel (0) target = $region49
    $region48: #{tpu_custom_call.1} parent=1 // pred_region
      %s446 = ssub.s32 128, 128
      %447 = vsyncadd [#allocation4], %s446
      %s448 = sshll.u32 [#allocation10], 4
      %s449 = int_to_ptr.vmem [resolvable:$true] %s448
      %454 = dma.vmem_to_hbm [thread:$0]  %s449, 128, %s7, [#allocation4], 64, 64, 4
    $region49: #{tpu_custom_call.1} parent=1 // pred_fallthru
      _
    // Predicated region
    $region50: #{tpu_custom_call.1} parent=1 // pred_check
      _
    $region51: #{tpu_custom_call.1} parent=1 // pred_check_branch
      %456 = sbr.rel (0) target = $region53
    $region52: #{tpu_custom_call.1} parent=1 // pred_region
      %457 = dma.done [#allocation4], 128
    $region53: #{tpu_custom_call.1} parent=1 // pred_fallthru
      _
    %458 = vsyncpa [#allocation3], 1
    %459 = vsyncpa [#allocation6], 1
    %460 = vsyncpa [#allocation9], 1
    %461 = vsyncpa [#allocation4], 1

</llo_original>
